<compile_context>
chip_gen: v5e
topology: v5e:2x2
jax: 0.10.0
libtpu: 0.0.40
codegen_flags: <defaults>
</compile_context>

<pallas_src>
import functools

import numpy as np
import jax
import jax.numpy as jnp
from jax.experimental import pallas as pl
from jax.experimental.pallas import tpu as pltpu


def _roll(a, shift, axis):
    """np.roll semantics with a guaranteed non-negative static shift."""
    n = a.shape[axis]
    return pltpu.roll(a, shift=shift % n, axis=axis)


def _harris_kernel(W, g0, g1, k_ref, colw_ref, x_ref, o_ref):
    """One packed tile of G images laid side by side along the lane axis.

    W        : static per-image width (lane-segment size)
    g0, g1   : static normalized 3-tap Gaussian weights (window=3, sigma=1)
    k_ref    : SMEM scalar-prefetch (1,) f32 -- Harris free parameter k
    colw_ref : (1, G*W) int32 -- within-image column index (0..W-1 repeated)
    x_ref    : (1, H, G*W) packed input tile
    o_ref    : (1, H, G*W) packed output tile
    """
    x = x_ref[0]                                   # (H, GW) f32
    H, GW = x.shape

    colw_row = colw_ref[...]                       # (1, GW) int32
    colw = jnp.broadcast_to(colw_row, (H, GW))     # hoisted once
    row = jax.lax.broadcasted_iota(jnp.int32, (H, GW), 0)
    left_e = colw == 0
    right_e = colw == (W - 1)
    top_e = row == 0
    bot_e = row == (H - 1)

    def up(a):  # a[i-1, :]  (wraps; border handled by masks)
        return _roll(a, 1, 0)

    def dn(a):  # a[i+1, :]
        return _roll(a, -1, 0)

    def lf(a):  # a[:, j-1]
        return _roll(a, 1, 1)

    def rt(a):  # a[:, j+1]
        return _roll(a, -1, 1)

    # --- spatial_gradient: normalized 3x3 Sobel (|K|.sum() == 8), replicate border
    xu = jnp.where(top_e, x, up(x))                # replicate row -1 -> row 0
    xd = jnp.where(bot_e, x, dn(x))                # replicate row H  -> row H-1
    row_sm = (xu + 2.0 * x + xd) * 0.125           # [1,2,1]/8 along H  (for dx)
    row_df = (xd - xu) * 0.125                     # [-1,0,1]/8 along H (for dy)

    sm_l = jnp.where(left_e, row_sm, lf(row_sm))   # replicate col borders
    sm_r = jnp.where(right_e, row_sm, rt(row_sm))
    dx = sm_r - sm_l                               # [-1,0,1] along W

    df_l = jnp.where(left_e, row_df, lf(row_df))
    df_r = jnp.where(right_e, row_df, rt(row_df))
    dy = df_l + 2.0 * row_df + df_r                # [1,2,1] along W

    # --- gaussian_blur2d((3,3), sigma=(1,1)), reflect border, separable
    def blur(a):
        au, ad = up(a), dn(a)
        a_m = jnp.where(top_e, ad, au)             # reflect: row -1 -> row 1
        a_p = jnp.where(bot_e, au, ad)             # reflect: row H  -> row H-2
        r = g0 * (a_m + a_p) + g1 * a
        rl, rr = lf(r), rt(r)
        r_m = jnp.where(left_e, rr, rl)            # reflect: col -1 -> col 1
        r_p = jnp.where(right_e, rl, rr)           # reflect: col W  -> col W-2
        return g0 * (r_m + r_p) + g1 * r

    dx2 = blur(dx * dx)
    dy2 = blur(dy * dy)
    dxy = blur(dx * dy)

    # --- Harris response R = det(M) - k * trace(M)^2, clamp at 1e-6
    k = k_ref[0]
    det_m = dx2 * dy2 - dxy * dxy
    trace_m = dx2 + dy2
    scores = jnp.maximum(det_m - k * trace_m * trace_m, 1e-6)

    # --- non_maxima_suppression2d, 3x3 window (zero fill == -inf pad: scores > 0)
    su = jnp.where(top_e, 0.0, up(scores))
    sd = jnp.where(bot_e, 0.0, dn(scores))
    rmax = jnp.maximum(jnp.maximum(su, sd), scores)
    rl = jnp.where(left_e, 0.0, lf(rmax))
    rr = jnp.where(right_e, 0.0, rt(rmax))
    pmax = jnp.maximum(jnp.maximum(rl, rr), rmax)
    nms = jnp.where(scores == pmax, scores, 0.0)   # neighbors are exact copies

    # --- adaptive_max_pool2d(output_size=1) per packed image + normalize
    m = jnp.max(nms, axis=0, keepdims=True)        # (1, GW) column max
    s = 1
    while s < W:                                   # segmented lane max (log-doubling)
        fwd = jnp.where(colw_row >= s, _roll(m, s, 1), 0.0)
        bwd = jnp.where(colw_row < W - s, _roll(m, -s, 1), 0.0)
        m = jnp.maximum(jnp.maximum(m, fwd), bwd)
        s *= 2
    inv = pl.reciprocal(m, approx=False)           # exact 1/max per image
    o_ref[0] = nms * inv


def corner_harris(x, k=0.04):
    """x: (B, C, H, W) float array. Returns (B, C, H, W) Harris response, max-normalized per (b, c)."""
    B, C, H, W = x.shape
    N = B * C
    xf = x.astype(jnp.float32).reshape(N, H, W)

    # Lane-dense packing: G whole images side by side along the lane axis so each
    # grid step stores full 128-lane vregs and amortizes per-step grid overhead.
    G = 1 if W >= 128 else min(N, max(1, 128 // W))
    ngroups = -(-N // G)
    Npad = ngroups * G
    if Npad != N:
        xf = jnp.concatenate([xf, jnp.zeros((Npad - N, H, W), jnp.float32)], axis=0)
    GW = G * W
    xp = xf.reshape(ngroups, G, H, W).transpose(0, 2, 1, 3).reshape(ngroups, H, GW)

    # Within-image column index (precomputed on host; avoids in-kernel integer %).
    colw = jnp.asarray(np.tile(np.arange(W, dtype=np.int32), G).reshape(1, GW))

    # Normalized 3-tap Gaussian (window=3, sigma=1), as in kornia get_gaussian_kernel.
    g = np.exp(-np.array([-1.0, 0.0, 1.0]) ** 2 / 2.0)
    g = g / g.sum()
    g0, g1 = float(g[0]), float(g[1])

    grid_spec = pltpu.PrefetchScalarGridSpec(
        num_scalar_prefetch=1,
        grid=(ngroups,),
        in_specs=[
            pl.BlockSpec((1, GW), lambda n, kref: (0, 0)),
            pl.BlockSpec((1, H, GW), lambda n, kref: (n, 0, 0)),
        ],
        out_specs=pl.BlockSpec((1, H, GW), lambda n, kref: (n, 0, 0)),
    )

    out = pl.pallas_call(
        functools.partial(_harris_kernel, W, g0, g1),
        out_shape=jax.ShapeDtypeStruct((ngroups, H, GW), jnp.float32),
        grid_spec=grid_spec,
        compiler_params=pltpu.CompilerParams(dimension_semantics=("parallel",)),
    )(
        jnp.asarray([k], dtype=jnp.float32),
        colw,
        xp,
    )

    out = out.reshape(ngroups, H, G, W).transpose(0, 2, 1, 3).reshape(Npad, H, W)[:N]
    return out.reshape(B, C, H, W).astype(x.dtype)


if __name__ == "__main__":
    key = jax.random.PRNGKey(0)
    B, C, H, W = 2, 4, 16, 16
    x = jax.random.uniform(key, (B, C, H, W), dtype=jnp.float32)

    # Deterministic "parameter" of the module: Harris free parameter k.
    k = 0.04

    out = corner_harris(x, k)
    out = jax.block_until_ready(out)

    assert out.shape == (B, C, H, W)
    assert bool(jnp.isfinite(out).all())
    # Per-(b, c) max-normalization means every channel's max response is ~1.
    assert bool(jnp.allclose(out.max(axis=(2, 3)), 1.0, atol=1e-5))
    print("KERNEL_OK")
</pallas_src>

<mosaic_0001>
module attributes {stable_mosaic.version = 11 : i64} {
  func.func @_harris_kernel(%arg0: i32, %arg1: memref<1xf32, #tpu.memory_space<smem>>, %arg2: memref<1x128xi32, #tpu.memory_space<vmem>>, %arg3: memref<1x16x128xf32, #tpu.memory_space<vmem>>, %arg4: memref<1x16x128xf32, #tpu.memory_space<vmem>>) attributes {dimension_semantics = [#tpu.dimension_semantics<parallel>], iteration_bounds = array<i64: 1>, scalar_prefetch = 1 : i64, scratch_operands = 0 : i64, tpu.core_type = #tpu.core_type<tc>, window_params = [{pipeline_mode = #tpu.pipeline_mode<synchronous>, transform_indices = @transform_0, window_bounds = array<i64: 1, 128>}, {transform_indices = @transform_1, window_bounds = array<i64: 1, 16, 128>}, {transform_indices = @transform_2, window_bounds = array<i64: 1, 16, 128>}]} {
    %c0 = arith.constant 0 : index
    %c0_0 = arith.constant 0 : index
    %c0_1 = arith.constant 0 : index
    %0 = vector.load %arg3[%c0, %c0_0, %c0_1] : memref<1x16x128xf32, #tpu.memory_space<vmem>>, vector<1x16x128xf32>
    %1 = vector.shape_cast %0 : vector<1x16x128xf32> to vector<16x128xf32>
    %c0_2 = arith.constant 0 : index
    %c0_3 = arith.constant 0 : index
    %2 = vector.load %arg2[%c0_2, %c0_3] : memref<1x128xi32, #tpu.memory_space<vmem>>, vector<1x128xi32>
    %3 = vector.shape_cast %2 : vector<1x128xi32> to vector<1x128xi32>
    %4 = vector.broadcast %3 : vector<1x128xi32> to vector<16x128xi32>
    %5 = tpu.iota {dimensions = array<i32: 0>} : vector<16x128xi32>
    %c0_i32 = arith.constant 0 : i32
    %6 = vector.broadcast %c0_i32 : i32 to vector<16x128xi32>
    %7 = arith.cmpi eq, %4, %6 : vector<16x128xi32>
    %c15_i32 = arith.constant 15 : i32
    %8 = vector.broadcast %c15_i32 : i32 to vector<16x128xi32>
    %9 = arith.cmpi eq, %4, %8 : vector<16x128xi32>
    %c0_i32_4 = arith.constant 0 : i32
    %10 = vector.broadcast %c0_i32_4 : i32 to vector<16x128xi32>
    %11 = arith.cmpi eq, %5, %10 : vector<16x128xi32>
    %c15_i32_5 = arith.constant 15 : i32
    %12 = vector.broadcast %c15_i32_5 : i32 to vector<16x128xi32>
    %13 = arith.cmpi eq, %5, %12 : vector<16x128xi32>
    %c1_i32 = arith.constant 1 : i32
    %14 = tpu.dynamic_rotate %1 by %c1_i32 dim 0 : vector<16x128xf32>, i32 -> vector<16x128xf32>
    %15 = arith.select %11, %1, %14 : vector<16x128xi1>, vector<16x128xf32>
    %c15_i32_6 = arith.constant 15 : i32
    %16 = tpu.dynamic_rotate %1 by %c15_i32_6 dim 0 : vector<16x128xf32>, i32 -> vector<16x128xf32>
    %17 = arith.select %13, %1, %16 : vector<16x128xi1>, vector<16x128xf32>
    %cst = arith.constant 2.000000e+00 : f32
    %18 = vector.broadcast %cst : f32 to vector<16x128xf32>
    %19 = arith.mulf %18, %1 : vector<16x128xf32>
    %20 = arith.addf %15, %19 : vector<16x128xf32>
    %21 = arith.addf %20, %17 : vector<16x128xf32>
    %cst_7 = arith.constant 1.250000e-01 : f32
    %22 = vector.broadcast %cst_7 : f32 to vector<16x128xf32>
    %23 = arith.mulf %21, %22 : vector<16x128xf32>
    %24 = arith.subf %17, %15 : vector<16x128xf32>
    %cst_8 = arith.constant 1.250000e-01 : f32
    %25 = vector.broadcast %cst_8 : f32 to vector<16x128xf32>
    %26 = arith.mulf %24, %25 : vector<16x128xf32>
    %c1_i32_9 = arith.constant 1 : i32
    %27 = tpu.dynamic_rotate %23 by %c1_i32_9 dim 1 : vector<16x128xf32>, i32 -> vector<16x128xf32>
    %28 = arith.select %7, %23, %27 : vector<16x128xi1>, vector<16x128xf32>
    %c127_i32 = arith.constant 127 : i32
    %29 = tpu.dynamic_rotate %23 by %c127_i32 dim 1 : vector<16x128xf32>, i32 -> vector<16x128xf32>
    %30 = arith.select %9, %23, %29 : vector<16x128xi1>, vector<16x128xf32>
    %31 = arith.subf %30, %28 : vector<16x128xf32>
    %c1_i32_10 = arith.constant 1 : i32
    %32 = tpu.dynamic_rotate %26 by %c1_i32_10 dim 1 : vector<16x128xf32>, i32 -> vector<16x128xf32>
    %33 = arith.select %7, %26, %32 : vector<16x128xi1>, vector<16x128xf32>
    %c127_i32_11 = arith.constant 127 : i32
    %34 = tpu.dynamic_rotate %26 by %c127_i32_11 dim 1 : vector<16x128xf32>, i32 -> vector<16x128xf32>
    %35 = arith.select %9, %26, %34 : vector<16x128xi1>, vector<16x128xf32>
    %cst_12 = arith.constant 2.000000e+00 : f32
    %36 = vector.broadcast %cst_12 : f32 to vector<16x128xf32>
    %37 = arith.mulf %36, %26 : vector<16x128xf32>
    %38 = arith.addf %33, %37 : vector<16x128xf32>
    %39 = arith.addf %38, %35 : vector<16x128xf32>
    %40 = arith.mulf %31, %31 : vector<16x128xf32>
    %c1_i32_13 = arith.constant 1 : i32
    %41 = tpu.dynamic_rotate %40 by %c1_i32_13 dim 0 : vector<16x128xf32>, i32 -> vector<16x128xf32>
    %c15_i32_14 = arith.constant 15 : i32
    %42 = tpu.dynamic_rotate %40 by %c15_i32_14 dim 0 : vector<16x128xf32>, i32 -> vector<16x128xf32>
    %43 = arith.select %11, %42, %41 : vector<16x128xi1>, vector<16x128xf32>
    %44 = arith.select %13, %41, %42 : vector<16x128xi1>, vector<16x128xf32>
    %45 = arith.addf %43, %44 : vector<16x128xf32>
    %cst_15 = arith.constant 0.274068624 : f32
    %46 = vector.broadcast %cst_15 : f32 to vector<16x128xf32>
    %47 = arith.mulf %46, %45 : vector<16x128xf32>
    %cst_16 = arith.constant 0.451862752 : f32
    %48 = vector.broadcast %cst_16 : f32 to vector<16x128xf32>
    %49 = arith.mulf %48, %40 : vector<16x128xf32>
    %50 = arith.addf %47, %49 : vector<16x128xf32>
    %c1_i32_17 = arith.constant 1 : i32
    %51 = tpu.dynamic_rotate %50 by %c1_i32_17 dim 1 : vector<16x128xf32>, i32 -> vector<16x128xf32>
    %c127_i32_18 = arith.constant 127 : i32
    %52 = tpu.dynamic_rotate %50 by %c127_i32_18 dim 1 : vector<16x128xf32>, i32 -> vector<16x128xf32>
    %53 = arith.select %7, %52, %51 : vector<16x128xi1>, vector<16x128xf32>
    %54 = arith.select %9, %51, %52 : vector<16x128xi1>, vector<16x128xf32>
    %55 = arith.addf %53, %54 : vector<16x128xf32>
    %cst_19 = arith.constant 0.274068624 : f32
    %56 = vector.broadcast %cst_19 : f32 to vector<16x128xf32>
    %57 = arith.mulf %56, %55 : vector<16x128xf32>
    %cst_20 = arith.constant 0.451862752 : f32
    %58 = vector.broadcast %cst_20 : f32 to vector<16x128xf32>
    %59 = arith.mulf %58, %50 : vector<16x128xf32>
    %60 = arith.addf %57, %59 : vector<16x128xf32>
    %61 = arith.mulf %39, %39 : vector<16x128xf32>
    %c1_i32_21 = arith.constant 1 : i32
    %62 = tpu.dynamic_rotate %61 by %c1_i32_21 dim 0 : vector<16x128xf32>, i32 -> vector<16x128xf32>
    %c15_i32_22 = arith.constant 15 : i32
    %63 = tpu.dynamic_rotate %61 by %c15_i32_22 dim 0 : vector<16x128xf32>, i32 -> vector<16x128xf32>
    %64 = arith.select %11, %63, %62 : vector<16x128xi1>, vector<16x128xf32>
    %65 = arith.select %13, %62, %63 : vector<16x128xi1>, vector<16x128xf32>
    %66 = arith.addf %64, %65 : vector<16x128xf32>
    %cst_23 = arith.constant 0.274068624 : f32
    %67 = vector.broadcast %cst_23 : f32 to vector<16x128xf32>
    %68 = arith.mulf %67, %66 : vector<16x128xf32>
    %cst_24 = arith.constant 0.451862752 : f32
    %69 = vector.broadcast %cst_24 : f32 to vector<16x128xf32>
    %70 = arith.mulf %69, %61 : vector<16x128xf32>
    %71 = arith.addf %68, %70 : vector<16x128xf32>
    %c1_i32_25 = arith.constant 1 : i32
    %72 = tpu.dynamic_rotate %71 by %c1_i32_25 dim 1 : vector<16x128xf32>, i32 -> vector<16x128xf32>
    %c127_i32_26 = arith.constant 127 : i32
    %73 = tpu.dynamic_rotate %71 by %c127_i32_26 dim 1 : vector<16x128xf32>, i32 -> vector<16x128xf32>
    %74 = arith.select %7, %73, %72 : vector<16x128xi1>, vector<16x128xf32>
    %75 = arith.select %9, %72, %73 : vector<16x128xi1>, vector<16x128xf32>
    %76 = arith.addf %74, %75 : vector<16x128xf32>
    %cst_27 = arith.constant 0.274068624 : f32
    %77 = vector.broadcast %cst_27 : f32 to vector<16x128xf32>
    %78 = arith.mulf %77, %76 : vector<16x128xf32>
    %cst_28 = arith.constant 0.451862752 : f32
    %79 = vector.broadcast %cst_28 : f32 to vector<16x128xf32>
    %80 = arith.mulf %79, %71 : vector<16x128xf32>
    %81 = arith.addf %78, %80 : vector<16x128xf32>
    %82 = arith.mulf %31, %39 : vector<16x128xf32>
    %c1_i32_29 = arith.constant 1 : i32
    %83 = tpu.dynamic_rotate %82 by %c1_i32_29 dim 0 : vector<16x128xf32>, i32 -> vector<16x128xf32>
    %c15_i32_30 = arith.constant 15 : i32
    %84 = tpu.dynamic_rotate %82 by %c15_i32_30 dim 0 : vector<16x128xf32>, i32 -> vector<16x128xf32>
    %85 = arith.select %11, %84, %83 : vector<16x128xi1>, vector<16x128xf32>
    %86 = arith.select %13, %83, %84 : vector<16x128xi1>, vector<16x128xf32>
    %87 = arith.addf %85, %86 : vector<16x128xf32>
    %cst_31 = arith.constant 0.274068624 : f32
    %88 = vector.broadcast %cst_31 : f32 to vector<16x128xf32>
    %89 = arith.mulf %88, %87 : vector<16x128xf32>
    %cst_32 = arith.constant 0.451862752 : f32
    %90 = vector.broadcast %cst_32 : f32 to vector<16x128xf32>
    %91 = arith.mulf %90, %82 : vector<16x128xf32>
    %92 = arith.addf %89, %91 : vector<16x128xf32>
    %c1_i32_33 = arith.constant 1 : i32
    %93 = tpu.dynamic_rotate %92 by %c1_i32_33 dim 1 : vector<16x128xf32>, i32 -> vector<16x128xf32>
    %c127_i32_34 = arith.constant 127 : i32
    %94 = tpu.dynamic_rotate %92 by %c127_i32_34 dim 1 : vector<16x128xf32>, i32 -> vector<16x128xf32>
    %95 = arith.select %7, %94, %93 : vector<16x128xi1>, vector<16x128xf32>
    %96 = arith.select %9, %93, %94 : vector<16x128xi1>, vector<16x128xf32>
    %97 = arith.addf %95, %96 : vector<16x128xf32>
    %cst_35 = arith.constant 0.274068624 : f32
    %98 = vector.broadcast %cst_35 : f32 to vector<16x128xf32>
    %99 = arith.mulf %98, %97 : vector<16x128xf32>
    %cst_36 = arith.constant 0.451862752 : f32
    %100 = vector.broadcast %cst_36 : f32 to vector<16x128xf32>
    %101 = arith.mulf %100, %92 : vector<16x128xf32>
    %102 = arith.addf %99, %101 : vector<16x128xf32>
    %c0_37 = arith.constant 0 : index
    %103 = memref.load %arg1[%c0_37] : memref<1xf32, #tpu.memory_space<smem>>
    %104 = arith.mulf %60, %81 : vector<16x128xf32>
    %105 = arith.mulf %102, %102 : vector<16x128xf32>
    %106 = arith.subf %104, %105 : vector<16x128xf32>
    %107 = arith.addf %60, %81 : vector<16x128xf32>
    %108 = vector.broadcast %103 : f32 to vector<16x128xf32>
    %109 = arith.mulf %108, %107 : vector<16x128xf32>
    %110 = arith.mulf %109, %107 : vector<16x128xf32>
    %111 = arith.subf %106, %110 : vector<16x128xf32>
    %cst_38 = arith.constant 9.99999997E-7 : f32
    %112 = vector.broadcast %cst_38 : f32 to vector<16x128xf32>
    %113 = arith.maximumf %111, %112 : vector<16x128xf32>
    %c1_i32_39 = arith.constant 1 : i32
    %114 = tpu.dynamic_rotate %113 by %c1_i32_39 dim 0 : vector<16x128xf32>, i32 -> vector<16x128xf32>
    %cst_40 = arith.constant 0.000000e+00 : f32
    %115 = vector.broadcast %cst_40 : f32 to vector<16x128xf32>
    %116 = arith.select %11, %115, %114 : vector<16x128xi1>, vector<16x128xf32>
    %c15_i32_41 = arith.constant 15 : i32
    %117 = tpu.dynamic_rotate %113 by %c15_i32_41 dim 0 : vector<16x128xf32>, i32 -> vector<16x128xf32>
    %cst_42 = arith.constant 0.000000e+00 : f32
    %118 = vector.broadcast %cst_42 : f32 to vector<16x128xf32>
    %119 = arith.select %13, %118, %117 : vector<16x128xi1>, vector<16x128xf32>
    %120 = arith.maximumf %116, %119 : vector<16x128xf32>
    %121 = arith.maximumf %120, %113 : vector<16x128xf32>
    %c1_i32_43 = arith.constant 1 : i32
    %122 = tpu.dynamic_rotate %121 by %c1_i32_43 dim 1 : vector<16x128xf32>, i32 -> vector<16x128xf32>
    %cst_44 = arith.constant 0.000000e+00 : f32
    %123 = vector.broadcast %cst_44 : f32 to vector<16x128xf32>
    %124 = arith.select %7, %123, %122 : vector<16x128xi1>, vector<16x128xf32>
    %c127_i32_45 = arith.constant 127 : i32
    %125 = tpu.dynamic_rotate %121 by %c127_i32_45 dim 1 : vector<16x128xf32>, i32 -> vector<16x128xf32>
    %cst_46 = arith.constant 0.000000e+00 : f32
    %126 = vector.broadcast %cst_46 : f32 to vector<16x128xf32>
    %127 = arith.select %9, %126, %125 : vector<16x128xi1>, vector<16x128xf32>
    %128 = arith.maximumf %124, %127 : vector<16x128xf32>
    %129 = arith.maximumf %128, %121 : vector<16x128xf32>
    %130 = arith.cmpf oeq, %113, %129 : vector<16x128xf32>
    %cst_47 = arith.constant 0.000000e+00 : f32
    %131 = vector.broadcast %cst_47 : f32 to vector<16x128xf32>
    %132 = arith.select %130, %113, %131 : vector<16x128xi1>, vector<16x128xf32>
    %cst_48 = arith.constant dense<0xFF800000> : vector<128xf32>
    %133 = vector.multi_reduction <maximumf>, %132, %cst_48 [0] : vector<16x128xf32> to vector<128xf32>
    %134 = vector.shape_cast %133 : vector<128xf32> to vector<1x128xf32>
    %c1_i32_49 = arith.constant 1 : i32
    %135 = vector.broadcast %c1_i32_49 : i32 to vector<1x128xi32>
    %136 = arith.cmpi sge, %2, %135 : vector<1x128xi32>
    %c1_i32_50 = arith.constant 1 : i32
    %137 = tpu.dynamic_rotate %134 by %c1_i32_50 dim 1 : vector<1x128xf32>, i32 -> vector<1x128xf32>
    %cst_51 = arith.constant 0.000000e+00 : f32
    %138 = vector.broadcast %cst_51 : f32 to vector<1x128xf32>
    %139 = arith.select %136, %137, %138 : vector<1x128xi1>, vector<1x128xf32>
    %c15_i32_52 = arith.constant 15 : i32
    %140 = vector.broadcast %c15_i32_52 : i32 to vector<1x128xi32>
    %141 = arith.cmpi slt, %2, %140 : vector<1x128xi32>
    %c127_i32_53 = arith.constant 127 : i32
    %142 = tpu.dynamic_rotate %134 by %c127_i32_53 dim 1 : vector<1x128xf32>, i32 -> vector<1x128xf32>
    %cst_54 = arith.constant 0.000000e+00 : f32
    %143 = vector.broadcast %cst_54 : f32 to vector<1x128xf32>
    %144 = arith.select %141, %142, %143 : vector<1x128xi1>, vector<1x128xf32>
    %145 = arith.maximumf %134, %139 : vector<1x128xf32>
    %146 = arith.maximumf %145, %144 : vector<1x128xf32>
    %c2_i32 = arith.constant 2 : i32
    %147 = vector.broadcast %c2_i32 : i32 to vector<1x128xi32>
    %148 = arith.cmpi sge, %2, %147 : vector<1x128xi32>
    %c2_i32_55 = arith.constant 2 : i32
    %149 = tpu.dynamic_rotate %146 by %c2_i32_55 dim 1 : vector<1x128xf32>, i32 -> vector<1x128xf32>
    %cst_56 = arith.constant 0.000000e+00 : f32
    %150 = vector.broadcast %cst_56 : f32 to vector<1x128xf32>
    %151 = arith.select %148, %149, %150 : vector<1x128xi1>, vector<1x128xf32>
    %c14_i32 = arith.constant 14 : i32
    %152 = vector.broadcast %c14_i32 : i32 to vector<1x128xi32>
    %153 = arith.cmpi slt, %2, %152 : vector<1x128xi32>
    %c126_i32 = arith.constant 126 : i32
    %154 = tpu.dynamic_rotate %146 by %c126_i32 dim 1 : vector<1x128xf32>, i32 -> vector<1x128xf32>
    %cst_57 = arith.constant 0.000000e+00 : f32
    %155 = vector.broadcast %cst_57 : f32 to vector<1x128xf32>
    %156 = arith.select %153, %154, %155 : vector<1x128xi1>, vector<1x128xf32>
    %157 = arith.maximumf %146, %151 : vector<1x128xf32>
    %158 = arith.maximumf %157, %156 : vector<1x128xf32>
    %c4_i32 = arith.constant 4 : i32
    %159 = vector.broadcast %c4_i32 : i32 to vector<1x128xi32>
    %160 = arith.cmpi sge, %2, %159 : vector<1x128xi32>
    %c4_i32_58 = arith.constant 4 : i32
    %161 = tpu.dynamic_rotate %158 by %c4_i32_58 dim 1 : vector<1x128xf32>, i32 -> vector<1x128xf32>
    %cst_59 = arith.constant 0.000000e+00 : f32
    %162 = vector.broadcast %cst_59 : f32 to vector<1x128xf32>
    %163 = arith.select %160, %161, %162 : vector<1x128xi1>, vector<1x128xf32>
    %c12_i32 = arith.constant 12 : i32
    %164 = vector.broadcast %c12_i32 : i32 to vector<1x128xi32>
    %165 = arith.cmpi slt, %2, %164 : vector<1x128xi32>
    %c124_i32 = arith.constant 124 : i32
    %166 = tpu.dynamic_rotate %158 by %c124_i32 dim 1 : vector<1x128xf32>, i32 -> vector<1x128xf32>
    %cst_60 = arith.constant 0.000000e+00 : f32
    %167 = vector.broadcast %cst_60 : f32 to vector<1x128xf32>
    %168 = arith.select %165, %166, %167 : vector<1x128xi1>, vector<1x128xf32>
    %169 = arith.maximumf %158, %163 : vector<1x128xf32>
    %170 = arith.maximumf %169, %168 : vector<1x128xf32>
    %c8_i32 = arith.constant 8 : i32
    %171 = vector.broadcast %c8_i32 : i32 to vector<1x128xi32>
    %172 = arith.cmpi sge, %2, %171 : vector<1x128xi32>
    %c8_i32_61 = arith.constant 8 : i32
    %173 = tpu.dynamic_rotate %170 by %c8_i32_61 dim 1 : vector<1x128xf32>, i32 -> vector<1x128xf32>
    %cst_62 = arith.constant 0.000000e+00 : f32
    %174 = vector.broadcast %cst_62 : f32 to vector<1x128xf32>
    %175 = arith.select %172, %173, %174 : vector<1x128xi1>, vector<1x128xf32>
    %c8_i32_63 = arith.constant 8 : i32
    %176 = vector.broadcast %c8_i32_63 : i32 to vector<1x128xi32>
    %177 = arith.cmpi slt, %2, %176 : vector<1x128xi32>
    %c120_i32 = arith.constant 120 : i32
    %178 = tpu.dynamic_rotate %170 by %c120_i32 dim 1 : vector<1x128xf32>, i32 -> vector<1x128xf32>
    %cst_64 = arith.constant 0.000000e+00 : f32
    %179 = vector.broadcast %cst_64 : f32 to vector<1x128xf32>
    %180 = arith.select %177, %178, %179 : vector<1x128xi1>, vector<1x128xf32>
    %181 = arith.maximumf %170, %175 : vector<1x128xf32>
    %182 = arith.maximumf %181, %180 : vector<1x128xf32>
    %183 = tpu.reciprocal %182 : vector<1x128xf32> -> vector<1x128xf32>
    %184 = vector.broadcast %183 : vector<1x128xf32> to vector<16x128xf32>
    %185 = arith.mulf %132, %184 : vector<16x128xf32>
    %c0_65 = arith.constant 0 : index
    %c0_66 = arith.constant 0 : index
    %c0_67 = arith.constant 0 : index
    %186 = vector.load %arg4[%c0_65, %c0_66, %c0_67] : memref<1x16x128xf32, #tpu.memory_space<vmem>>, vector<1x16x128xf32>
    %187 = vector.shape_cast %186 : vector<1x16x128xf32> to vector<16x128xf32>
    %188 = vector.shape_cast %185 : vector<16x128xf32> to vector<1x16x128xf32>
    tpu.vector_store %arg4[%c0_65, %c0_66, %c0_67], %188 {strides = array<i32>} : memref<1x16x128xf32, #tpu.memory_space<vmem>>, vector<1x16x128xf32>,
    return
  }
  func.func @transform_0(%arg0: i32, %arg1: memref<1xf32, #tpu.memory_space<smem>>) -> (i32, i32) {
    %c0_i32 = arith.constant 0 : i32
    %c0_i32_0 = arith.constant 0 : i32
    %c0_i32_1 = arith.constant 0 : i32
    return %c0_i32, %c0_i32_0 : i32, i32
  }
  func.func @transform_1(%arg0: i32, %arg1: memref<1xf32, #tpu.memory_space<smem>>) -> (i32, i32, i32) {
    %c0_i32 = arith.constant 0 : i32
    %c0_i32_0 = arith.constant 0 : i32
    %c0_i32_1 = arith.constant 0 : i32
    return %arg0, %c0_i32, %c0_i32_0 : i32, i32, i32
  }
  func.func @transform_2(%arg0: i32, %arg1: memref<1xf32, #tpu.memory_space<smem>>) -> (i32, i32, i32) {
    %c0_i32 = arith.constant 0 : i32
    %c0_i32_0 = arith.constant 0 : i32
    %c0_i32_1 = arith.constant 0 : i32
    return %arg0, %c0_i32, %c0_i32_0 : i32, i32, i32
  }
}

</mosaic_0001>

<llo_original>
// kernel: tpu_custom_call.1
$region0: #{tpu_custom_call.1}
  #allocation0 [shape = 'u32[]', space=smem, size = 0x4, offset = 0x4, fixed_abs, tag = 'smem constant byte address 0x4 - core index']
  #allocation1 [shape = 'u32[72,128]{1,0:T(1,128)}', space=vmem, size = 0x9000, scoped, tag = 'internal scratch']
  #allocation2 [shape = 's32[1]{0}', space=sflag, size = 0x4, scoped, tag = 'scoped memory for tpu_custom_call.1']
  #allocation3 [shape = 'f32[1]{0:T(128)S(6)}', space=smem, size = 0x200, scoped, tag = 'prefetched SMEM operand 0']
  %s0 = inlined_call_operand.<no memory space> [shape: f32[1], index: 0, kind: input, shape index: {}]
  %s1 = inlined_call_operand.vmem [shape: s32[1,128], index: 1, kind: input, shape index: {}]
  %s2 = inlined_call_operand.hbm [shape: f32[1,16,128], index: 2, kind: input, shape index: {}]
  %s3 = inlined_call_operand.hbm [shape: f32[1,16,128], index: 3, kind: output, shape index: {}]
  %s4 = sld [smem:[#allocation0]]
  $region22: #{tpu_custom_call.1} parent=0
    _
  %s6 = ssub.s32 1, %s4
  %s7 = scalar_select 0, %s6, %s4
  %8 = sst [smem:[#allocation3]] %s0
  $region1: #{tpu_custom_call.1} parent=0
    #allocation4 [shape = 'u8[8192]{0}', space=vmem, size = 0x2000, scoped, tag = 'input window, operand 2, single buffered']
    #allocation5 [shape = 's32[1]{0}', space=sflag, size = 0x4, scoped, tag = 'scoped memory for tpu_custom_call.1']
    #allocation6 [shape = 's32[1]{0}', space=sflag, size = 0x4, scoped, tag = 'scoped memory for tpu_custom_call.1']
    #allocation7 [shape = 'u8[8192]{0}', space=vmem, size = 0x2000, scoped, tag = 'output window, operand 0, single buffered']
    %9 = vsyncpa [#allocation5], 0
    %10 = vsyncpa [#allocation6], 0
    // Predicated region
    $region2: #{tpu_custom_call.1} parent=1 // pred_check
      _
    $region3: #{tpu_custom_call.1} parent=1 // pred_check_branch
      %12 = sbr.rel (0) target = $region5
    $region4: #{tpu_custom_call.1} parent=1 // pred_region
      _
    $region5: #{tpu_custom_call.1} parent=1 // pred_fallthru
      _
    // Predicated region
    $region6: #{tpu_custom_call.1} parent=1 // pred_check
      _
    $region7: #{tpu_custom_call.1} parent=1 // pred_check_branch
      %14 = sbr.rel (0) target = $region9
    $region8: #{tpu_custom_call.1} parent=1 // pred_region
      %16 = vsyncadd [#allocation5], 0
      %s17 = sshll.u32 %s2, 4
      %s18 = int_to_ptr.hbm [resolvable:$true] %s17
      %s19 = sshll.u32 [#allocation4], 4
      %s20 = int_to_ptr.vmem [resolvable:$true] %s19
      %25 = dma.hbm_to_vmem [thread:$0]  %s18, 256, %s20, [#allocation5], 128, 128, 8
    $region9: #{tpu_custom_call.1} parent=1 // pred_fallthru
      _
    // Predicated region
    $region10: #{tpu_custom_call.1} parent=1 // pred_check
      _
    $region11: #{tpu_custom_call.1} parent=1 // pred_check_branch
      %27 = sbr.rel (0) target = $region13
    $region12: #{tpu_custom_call.1} parent=1 // pred_region
      %29 = dma.done [#allocation5], 256
    $region13: #{tpu_custom_call.1} parent=1 // pred_fallthru
      _
    %v30 = vld [vmem:[#allocation4] sm:$0xff]
    %v31 = vld [vmem:[#allocation4 + $0x8] sm:$0xff]
    %v32 = vld [vmem:[%s1] sm:$0x1]
    %v33 = vperm.slane %v32, 0
    %v34 = vlaneseq
    %v35 = vshrl.u32 %v34, 7
    %v36 = vadd.s32 %v35, 8
    %vm37 = vcmp.eq.s32.totalorder %v33, 0
    %vm38 = vcmp.eq.s32.totalorder %v33, 15
    %vm39 = vcmp.eq.s32.totalorder %v35, 0
    %vm40 = vcmp.eq.s32.totalorder %v36, 0
    %vm41 = vcmp.eq.s32.totalorder %v35, 15
    %vm42 = vcmp.eq.s32.totalorder %v36, 15
    %v43 = vrot.slane %v30, 7
    %v44 = vrot.slane %v31, 7
    %vm45 = vcmp.lt.s32.totalorder %v35, 1
    %v46 = vsel %vm45, %v43, %v44
    %v47 = vsel %vm45, %v44, %v43
    %v48 = vsel %vm39, %v30, %v47
    %v49 = vsel %vm40, %v31, %v46
    %v50 = vrot.slane %v30, 1
    %v51 = vrot.slane %v31, 1
    %vm52 = vcmp.lt.s32.totalorder %v35, 7
    %v53 = vsel %vm52, %v50, %v51
    %v54 = vsel %vm52, %v51, %v50
    %v55 = vsel %vm41, %v30, %v53
    %v56 = vsel %vm42, %v31, %v54
    %v57 = vmul.f32 %v30, 2.0
    %v58 = vmul.f32 %v31, 2.0
    %v59 = vadd.f32 %v48, %v57
    %v60 = vadd.f32 %v49, %v58
    %v61 = vadd.f32 %v59, %v55
    %v62 = vadd.f32 %v60, %v56
    %v63 = vmul.f32 %v61, 0.125
    %v64 = vmul.f32 %v62, 0.125
    %v65 = vsub.f32 %v55, %v48
    %v66 = vsub.f32 %v56, %v49
    %v67 = vmul.f32 %v65, 0.125
    %v68 = vmul.f32 %v66, 0.125
    %69 = vrot.lane.b32.xlu0 %v63, 1
    %v70 = vpop.permute.xlu0 %69
    %71 = vrot.lane.b32.xlu0 %v64, 1
    %v72 = vpop.permute.xlu0 %71
    %v73 = vsel %vm37, %v63, %v70
    %v74 = vsel %vm37, %v64, %v72
    %75 = vrot.lane.b32.xlu0 %v63, 127
    %v76 = vpop.permute.xlu0 %75
    %77 = vrot.lane.b32.xlu0 %v64, 127
    %v78 = vpop.permute.xlu0 %77
    %v79 = vsel %vm38, %v63, %v76
    %v80 = vsel %vm38, %v64, %v78
    %v81 = vsub.f32 %v79, %v73
    %v82 = vsub.f32 %v80, %v74
    %83 = vrot.lane.b32.xlu0 %v67, 1
    %v84 = vpop.permute.xlu0 %83
    %85 = vrot.lane.b32.xlu0 %v68, 1
    %v86 = vpop.permute.xlu0 %85
    %v87 = vsel %vm37, %v67, %v84
    %v88 = vsel %vm37, %v68, %v86
    %89 = vrot.lane.b32.xlu0 %v67, 127
    %v90 = vpop.permute.xlu0 %89
    %91 = vrot.lane.b32.xlu0 %v68, 127
    %v92 = vpop.permute.xlu0 %91
    %v93 = vsel %vm38, %v67, %v90
    %v94 = vsel %vm38, %v68, %v92
    %v95 = vmul.f32 %v67, 2.0
    %v96 = vmul.f32 %v68, 2.0
    %v97 = vadd.f32 %v87, %v95
    %v98 = vadd.f32 %v88, %v96
    %v99 = vadd.f32 %v97, %v93
    %v100 = vadd.f32 %v98, %v94
    %v101 = vmul.f32 %v81, %v81
    %v102 = vmul.f32 %v82, %v82
    %v103 = vrot.slane %v101, 7
    %v104 = vrot.slane %v102, 7
    %v105 = vsel %vm45, %v103, %v104
    %v106 = vsel %vm45, %v104, %v103
    %v107 = vrot.slane %v101, 1
    %v108 = vrot.slane %v102, 1
    %v109 = vsel %vm52, %v107, %v108
    %v110 = vsel %vm52, %v108, %v107
    %v111 = vsel %vm39, %v109, %v106
    %v112 = vsel %vm40, %v110, %v105
    %v113 = vsel %vm41, %v106, %v109
    %v114 = vsel %vm42, %v105, %v110
    %v115 = vadd.f32 %v111, %v113
    %v116 = vadd.f32 %v112, %v114
    %v117 = vmul.f32 %v115, 0.27406862
    %v118 = vmul.f32 %v116, 0.27406862
    %v119 = vmul.f32 %v101, 0.45186275
    %v120 = vmul.f32 %v102, 0.45186275
    %v121 = vadd.f32 %v117, %v119
    %v122 = vadd.f32 %v118, %v120
    %123 = vrot.lane.b32.xlu0 %v121, 1
    %v124 = vpop.permute.xlu0 %123
    %125 = vrot.lane.b32.xlu0 %v122, 1
    %v126 = vpop.permute.xlu0 %125
    %127 = vrot.lane.b32.xlu0 %v121, 127
    %v128 = vpop.permute.xlu0 %127
    %129 = vrot.lane.b32.xlu0 %v122, 127
    %v130 = vpop.permute.xlu0 %129
    %v131 = vsel %vm37, %v128, %v124
    %v132 = vsel %vm37, %v130, %v126
    %v133 = vsel %vm38, %v124, %v128
    %v134 = vsel %vm38, %v126, %v130
    %v135 = vadd.f32 %v131, %v133
    %v136 = vadd.f32 %v132, %v134
    %v137 = vmul.f32 %v135, 0.27406862
    %v138 = vmul.f32 %v136, 0.27406862
    %v139 = vmul.f32 %v121, 0.45186275
    %v140 = vmul.f32 %v122, 0.45186275
    %v141 = vadd.f32 %v137, %v139
    %v142 = vadd.f32 %v138, %v140
    %v143 = vmul.f32 %v99, %v99
    %v144 = vmul.f32 %v100, %v100
    %v145 = vrot.slane %v143, 7
    %v146 = vrot.slane %v144, 7
    %v147 = vsel %vm45, %v145, %v146
    %v148 = vsel %vm45, %v146, %v145
    %v149 = vrot.slane %v143, 1
    %v150 = vrot.slane %v144, 1
    %v151 = vsel %vm52, %v149, %v150
    %v152 = vsel %vm52, %v150, %v149
    %v153 = vsel %vm39, %v151, %v148
    %v154 = vsel %vm40, %v152, %v147
    %v155 = vsel %vm41, %v148, %v151
    %v156 = vsel %vm42, %v147, %v152
    %v157 = vadd.f32 %v153, %v155
    %v158 = vadd.f32 %v154, %v156
    %v159 = vmul.f32 %v157, 0.27406862
    %v160 = vmul.f32 %v158, 0.27406862
    %v161 = vmul.f32 %v143, 0.45186275
    %v162 = vmul.f32 %v144, 0.45186275
    %v163 = vadd.f32 %v159, %v161
    %v164 = vadd.f32 %v160, %v162
    %165 = vrot.lane.b32.xlu0 %v163, 1
    %v166 = vpop.permute.xlu0 %165
    %167 = vrot.lane.b32.xlu0 %v164, 1
    %v168 = vpop.permute.xlu0 %167
    %169 = vrot.lane.b32.xlu0 %v163, 127
    %v170 = vpop.permute.xlu0 %169
    %171 = vrot.lane.b32.xlu0 %v164, 127
    %v172 = vpop.permute.xlu0 %171
    %v173 = vsel %vm37, %v170, %v166
    %v174 = vsel %vm37, %v172, %v168
    %v175 = vsel %vm38, %v166, %v170
    %v176 = vsel %vm38, %v168, %v172
    %v177 = vadd.f32 %v173, %v175
    %v178 = vadd.f32 %v174, %v176
    %v179 = vmul.f32 %v177, 0.27406862
    %v180 = vmul.f32 %v178, 0.27406862
    %v181 = vmul.f32 %v163, 0.45186275
    %v182 = vmul.f32 %v164, 0.45186275
    %v183 = vadd.f32 %v179, %v181
    %v184 = vadd.f32 %v180, %v182
    %v185 = vmul.f32 %v81, %v99
    %v186 = vmul.f32 %v82, %v100
    %v187 = vrot.slane %v185, 7
    %v188 = vrot.slane %v186, 7
    %v189 = vsel %vm45, %v187, %v188
    %v190 = vsel %vm45, %v188, %v187
    %v191 = vrot.slane %v185, 1
    %v192 = vrot.slane %v186, 1
    %v193 = vsel %vm52, %v191, %v192
    %v194 = vsel %vm52, %v192, %v191
    %v195 = vsel %vm39, %v193, %v190
    %v196 = vsel %vm40, %v194, %v189
    %v197 = vsel %vm41, %v190, %v193
    %v198 = vsel %vm42, %v189, %v194
    %v199 = vadd.f32 %v195, %v197
    %v200 = vadd.f32 %v196, %v198
    %v201 = vmul.f32 %v199, 0.27406862
    %v202 = vmul.f32 %v200, 0.27406862
    %v203 = vmul.f32 %v185, 0.45186275
    %v204 = vmul.f32 %v186, 0.45186275
    %v205 = vadd.f32 %v201, %v203
    %v206 = vadd.f32 %v202, %v204
    %207 = vrot.lane.b32.xlu0 %v205, 1
    %v208 = vpop.permute.xlu0 %207
    %209 = vrot.lane.b32.xlu0 %v206, 1
    %v210 = vpop.permute.xlu0 %209
    %211 = vrot.lane.b32.xlu0 %v205, 127
    %v212 = vpop.permute.xlu0 %211
    %213 = vrot.lane.b32.xlu0 %v206, 127
    %v214 = vpop.permute.xlu0 %213
    %v215 = vsel %vm37, %v212, %v208
    %v216 = vsel %vm37, %v214, %v210
    %v217 = vsel %vm38, %v208, %v212
    %v218 = vsel %vm38, %v210, %v214
    %v219 = vadd.f32 %v215, %v217
    %v220 = vadd.f32 %v216, %v218
    %v221 = vmul.f32 %v219, 0.27406862
    %v222 = vmul.f32 %v220, 0.27406862
    %v223 = vmul.f32 %v205, 0.45186275
    %v224 = vmul.f32 %v206, 0.45186275
    %v225 = vadd.f32 %v221, %v223
    %v226 = vadd.f32 %v222, %v224
    %s227 = sld [smem:[#allocation3]]
    %v228 = vmul.f32 %v141, %v183
    %v229 = vmul.f32 %v142, %v184
    %v230 = vmul.f32 %v225, %v225
    %v231 = vmul.f32 %v226, %v226
    %v232 = vsub.f32 %v228, %v230
    %v233 = vsub.f32 %v229, %v231
    %v234 = vadd.f32 %v141, %v183
    %v235 = vadd.f32 %v142, %v184
    %v236 = vstv %s227
    %v237 = vmul.f32 %v236, %v234
    %v238 = vmul.f32 %v236, %v235
    %v239 = vmul.f32 %v237, %v234
    %v240 = vmul.f32 %v238, %v235
    %v241 = vsub.f32 %v232, %v239
    %v242 = vsub.f32 %v233, %v240
    %v243 = vmax.f32 %v241, 1e-06
    %v244 = vmax.f32 %v242, 1e-06
    %v245 = vrot.slane %v243, 7
    %v246 = vrot.slane %v244, 7
    %v247 = vsel %vm45, %v245, %v246
    %v248 = vsel %vm45, %v246, %v245
    %v249 = vsel %vm39, 0.0, %v248
    %v250 = vsel %vm40, 0.0, %v247
    %v251 = vrot.slane %v243, 1
    %v252 = vrot.slane %v244, 1
    %v253 = vsel %vm52, %v251, %v252
    %v254 = vsel %vm52, %v252, %v251
    %v255 = vsel %vm41, 0.0, %v253
    %v256 = vsel %vm42, 0.0, %v254
    %v257 = vmax.f32 %v249, %v255
    %v258 = vmax.f32 %v250, %v256
    %v259 = vmax.f32 %v257, %v243
    %v260 = vmax.f32 %v258, %v244
    %261 = vrot.lane.b32.xlu0 %v259, 1
    %v262 = vpop.permute.xlu0 %261
    %263 = vrot.lane.b32.xlu0 %v260, 1
    %v264 = vpop.permute.xlu0 %263
    %v265 = vsel %vm37, 0.0, %v262
    %v266 = vsel %vm37, 0.0, %v264
    %267 = vrot.lane.b32.xlu0 %v259, 127
    %v268 = vpop.permute.xlu0 %267
    %269 = vrot.lane.b32.xlu0 %v260, 127
    %v270 = vpop.permute.xlu0 %269
    %v271 = vsel %vm38, 0.0, %v268
    %v272 = vsel %vm38, 0.0, %v270
    %v273 = vmax.f32 %v265, %v271
    %v274 = vmax.f32 %v266, %v272
    %v275 = vmax.f32 %v273, %v259
    %v276 = vmax.f32 %v274, %v260
    %vm277 = vcmp.eq.f32.partialorder %v243, %v275
    %vm278 = vcmp.eq.f32.partialorder %v244, %v276
    %v279 = vsel %vm277, %v243, 0.0
    %v280 = vsel %vm278, %v244, 0.0
    %v281 = vmax.f32 %v279, %v280
    %v282 = vrot.slane %v281, 4
    %v283 = vmax.f32 %v281, %v282
    %v284 = vrot.slane %v283, 2
    %v285 = vmax.f32 %v283, %v284
    %v286 = vrot.slane %v285, 1
    %v287 = vmax.f32 %v285, %v286
    %vm288 = vcmp.ge.s32.totalorder %v32, 1
    %289 = vrot.lane.b32.xlu0 %v287, 1
    %v290 = vpop.permute.xlu0 %289
    %v291 = vsel %vm288, %v290, 0.0
    %vm292 = vcmp.lt.s32.totalorder %v32, 15
    %293 = vrot.lane.b32.xlu0 %v287, 127
    %v294 = vpop.permute.xlu0 %293
    %v295 = vsel %vm292, %v294, 0.0
    %v296 = vmax.f32 %v287, %v291
    %v297 = vmax.f32 %v296, %v295
    %vm298 = vcmp.ge.s32.totalorder %v32, 2
    %299 = vrot.lane.b32.xlu0 %v297, 2
    %v300 = vpop.permute.xlu0 %299
    %v301 = vsel %vm298, %v300, 0.0
    %vm302 = vcmp.lt.s32.totalorder %v32, 14
    %303 = vrot.lane.b32.xlu0 %v297, 126
    %v304 = vpop.permute.xlu0 %303
    %v305 = vsel %vm302, %v304, 0.0
    %v306 = vmax.f32 %v297, %v301
    %v307 = vmax.f32 %v306, %v305
    %vm308 = vcmp.ge.s32.totalorder %v32, 4
    %309 = vrot.lane.b32.xlu0 %v307, 4
    %v310 = vpop.permute.xlu0 %309
    %v311 = vsel %vm308, %v310, 0.0
    %vm312 = vcmp.lt.s32.totalorder %v32, 12
    %313 = vrot.lane.b32.xlu0 %v307, 124
    %v314 = vpop.permute.xlu0 %313
    %v315 = vsel %vm312, %v314, 0.0
    %v316 = vmax.f32 %v307, %v311
    %v317 = vmax.f32 %v316, %v315
    %vm318 = vcmp.ge.s32.totalorder %v32, 8
    %319 = vrot.lane.b32.xlu0 %v317, 8
    %v320 = vpop.permute.xlu0 %319
    %v321 = vsel %vm318, %v320, 0.0
    %vm322 = vcmp.lt.s32.totalorder %v32, 8
    %323 = vrot.lane.b32.xlu0 %v317, 120
    %v324 = vpop.permute.xlu0 %323
    %v325 = vsel %vm322, %v324, 0.0
    %v326 = vmax.f32 %v317, %v321
    %v327 = vmax.f32 %v326, %v325
    %v328 = vrcp.pop %v327
    %v329 = vmul.f32 %v327, %v328
    %v330 = vsub.f32 1.0, %v329
    %v331 = vmul.f32 %v328, %v330
    %v332 = vadd.f32 %v328, %v331
    %vm333 = vweird.f32 %v327
    %vm334 = vweird.f32 %v328
    %vm335 = vmor %vm333, %vm334
    %v336 = vsel %vm335, %v328, %v332
    %v337 = vand.u32 2147483647, %v327
    %vm338 = vcmp.eq.f32.partialorder %v337, 8.507059e+37
    %v339 = vand.u32 %v327, 2147483648
    %v340 = vor.u32 1.1754944e-38, %v339
    %v341 = vsel %vm338, %v340, %v336
    %v342 = vperm.slane %v341, 0
    %v343 = vmul.f32 %v279, %v342
    %v344 = vmul.f32 %v280, %v342
    %345 = vst [vmem:[#allocation7] sm:$0xff] %v343
    %346 = vst [vmem:[#allocation7 + $0x8] sm:$0xff] %v344
    // Predicated region
    $region14: #{tpu_custom_call.1} parent=1 // pred_check
      _
    $region15: #{tpu_custom_call.1} parent=1 // pred_check_branch
      %348 = sbr.rel (0) target = $region17
    $region16: #{tpu_custom_call.1} parent=1 // pred_region
      %350 = vsyncadd [#allocation6], 0
      %s351 = sshll.u32 [#allocation7], 4
      %s352 = int_to_ptr.vmem [resolvable:$true] %s351
      %s353 = sshll.u32 %s3, 4
      %s354 = int_to_ptr.hbm [resolvable:$true] %s353
      %359 = dma.vmem_to_hbm [thread:$0]  %s352, 256, %s354, [#allocation6], 128, 128, 8
    $region17: #{tpu_custom_call.1} parent=1 // pred_fallthru
      _
    // Predicated region
    $region18: #{tpu_custom_call.1} parent=1 // pred_check
      _
    $region19: #{tpu_custom_call.1} parent=1 // pred_check_branch
      %361 = sbr.rel (0) target = $region21
    $region20: #{tpu_custom_call.1} parent=1 // pred_region
      %363 = dma.done [#allocation6], 256
    $region21: #{tpu_custom_call.1} parent=1 // pred_fallthru
      _
    %364 = vsyncpa [#allocation5], 1
    %365 = vsyncpa [#allocation6], 1

</llo_original>
